<compile_context>
chip_gen: v7x
topology: tpu7x:2x2x1
jax: 0.10.0
libtpu: 0.0.40
codegen_flags: <defaults>
</compile_context>

<pallas_src>
import jax
import jax.numpy as jnp
from jax import lax
from jax.experimental import pallas as pl
from jax.experimental.pallas import tpu as pltpu


_MIB = 1024 * 1024


def _round_down(x, m):
    return (x // m) * m


def _vmem_capacity_bytes():
    try:
        return int(pltpu.get_tpu_info().vmem_capacity_bytes)
    except Exception:
        return 64 * _MIB  # conservative default (v7x per-TC VMEM)


# ---------------------------------------------------------------------------
# Prep: c_scaled = sigmoid(weight_u) * (tril(sigmoid(R), -1) + tril(...)^T)
# ---------------------------------------------------------------------------
def _prep_kernel(u_ref, r_ref, rt_ref, c_ref):
    # u_ref: SMEM (1,) f32.  r_ref / rt_ref / c_ref: VMEM (tl, L).
    tl, L = r_ref.shape
    row0 = pl.program_id(0) * tl
    row = lax.broadcasted_iota(jnp.int32, (tl, L), 0) + row0
    col = lax.broadcasted_iota(jnp.int32, (tl, L), 1)
    s = jax.nn.sigmoid(r_ref[...].astype(jnp.float32))
    st = jax.nn.sigmoid(rt_ref[...].astype(jnp.float32))
    zero = jnp.zeros((tl, L), jnp.float32)
    # c = tril(s, -1) + tril(s, -1)^T built from masked s / s^T; diag stays 0.
    c = jnp.where(row > col, s, zero) + jnp.where(row < col, st, zero)
    c_ref[...] = u_ref[0] * c


# ---------------------------------------------------------------------------
# Blend: out = c_scaled + (1 - u) * attn       (pure HBM streaming, one FMA)
# ---------------------------------------------------------------------------
def _blend_kernel(omu_ref, c_ref, attn_ref, out_ref):
    w = omu_ref[0]                                   # (1 - u), SMEM f32 scalar
    a = attn_ref[...].astype(jnp.float32)            # (tn, tm)
    out_ref[...] = (c_ref[...] + w * a).astype(out_ref.dtype)


def rnn_attention_score(attn_weights, rnn_inductive, weight_u):
    """Pallas forward of RNNAttentionScore.

    attn_weights : (..., L, L)
    rnn_inductive: (L, L)
    weight_u     : (1,)
    Returns (blended attn (..., L, L), sigmoid(weight_u) with shape (1,)).
    """
    L = rnn_inductive.shape[0]
    assert rnn_inductive.shape == (L, L)
    assert attn_weights.shape[-2:] == (L, L)

    # Scalar gate: computed once in the wrapper, delivered to both kernels
    # through SMEM (no (1,1) VMEM tile / per-step splat in the streaming loop).
    u = jax.nn.sigmoid(weight_u.astype(jnp.float32)).reshape(1)      # (1,) f32
    one_minus_u = 1.0 - u                                            # (1,) f32

    vmem_cap = _vmem_capacity_bytes()
    # Budget for the double-buffered pipeline blocks of the blend; headroom
    # is left under the physical capacity (gen-aware: 32 MiB on v7x, 48 MiB
    # on v5e/v6e).
    vmem_budget = min(vmem_cap // 2, 48 * _MIB)
    vmem_limit = int(min(vmem_budget + 16 * _MIB, vmem_cap - 8 * _MIB))

    # ------------------- prep: c_scaled (L, L) f32, row-tiled ---------------
    r = rnn_inductive
    rt = rnn_inductive.T            # wrapper-side transpose (layout plumbing)

    if L <= 8:
        tl = L
    else:
        bytes_per_row = L * 4 * 3 * 2        # f32 r + rt + c, double-buffered
        prep_budget = min(vmem_budget, 24 * _MIB)
        tl = min(L, max(8, _round_down(prep_budget // bytes_per_row, 8)))

    c_scaled = pl.pallas_call(
        _prep_kernel,
        out_shape=jax.ShapeDtypeStruct((L, L), jnp.float32),
        grid=(pl.cdiv(L, tl),),
        in_specs=[
            pl.BlockSpec(memory_space=pltpu.MemorySpace.SMEM),       # u
            pl.BlockSpec((tl, L), lambda i: (i, 0)),                 # R
            pl.BlockSpec((tl, L), lambda i: (i, 0)),                 # R^T
        ],
        out_specs=pl.BlockSpec((tl, L), lambda i: (i, 0)),
        compiler_params=pltpu.CompilerParams(
            dimension_semantics=("parallel",),
            vmem_limit_bytes=vmem_limit,
        ),
    )(u, r, rt)

    # ---------------- blend: lane-dense (N, L*L) slab, tiled ----------------
    lead = attn_weights.shape[:-2]
    N = 1
    for d in lead:
        N *= d
    M = L * L
    attn_flat = attn_weights.reshape(N, M)
    c_flat = c_scaled.reshape(1, M)

    in_bytes = attn_weights.dtype.itemsize
    out_bytes = in_bytes
    # Largest block whose double-buffered in+out footprint fits the budget.
    max_block_elems = max(1, vmem_budget // (2 * (in_bytes + out_bytes)))

    if M <= max_block_elems:
        tm = M
        if N <= 8:
            tn = N
        else:
            rows_fit = max(8, _round_down(max_block_elems // M, 8))
            tn = min(N, rows_fit)
    else:
        # Huge L*L: tile the lane dim as well so VMEM never over-subscribes.
        tn = min(N, 8)
        tm = min(M, max(128, _round_down(max_block_elems // max(tn, 1), 128)))

    grid_n = pl.cdiv(N, tn)
    grid_m = pl.cdiv(M, tm)
    # v7x megacore: guarantee >=2 parallel grid steps so both TensorCores get
    # work (free on single-TC v5e/v6e).
    if grid_n * grid_m < 2 and M >= 256:
        tm = max(128, _round_down((M + 1) // 2, 128))
        grid_m = pl.cdiv(M, tm)

    out_flat = pl.pallas_call(
        _blend_kernel,
        out_shape=jax.ShapeDtypeStruct((N, M), attn_weights.dtype),
        grid=(grid_n, grid_m),
        in_specs=[
            pl.BlockSpec(memory_space=pltpu.MemorySpace.SMEM),       # (1-u)
            pl.BlockSpec((1, tm), lambda i, j: (0, j)),              # c_scaled
            pl.BlockSpec((tn, tm), lambda i, j: (i, j)),             # attn
        ],
        out_specs=pl.BlockSpec((tn, tm), lambda i, j: (i, j)),
        input_output_aliases={2: 0},    # attn is dead after the blend
        compiler_params=pltpu.CompilerParams(
            dimension_semantics=("parallel", "parallel"),
            vmem_limit_bytes=vmem_limit,
        ),
    )(one_minus_u, c_flat, attn_flat)

    out = out_flat.reshape(*lead, L, L)
    return out, u


def _reference(attn_weights, rnn_inductive, weight_u):
    # Pure-JAX mirror of the PyTorch forward.
    u = jax.nn.sigmoid(weight_u)                  # (1,)
    s = jax.nn.sigmoid(rnn_inductive)
    a = jnp.tril(s, k=-1)
    c = a + a.T
    out = u * c + (1.0 - u) * attn_weights
    return out, u


if __name__ == "__main__":
    key = jax.random.PRNGKey(0)
    k1, k2, k3 = jax.random.split(key, 3)

    B, H, L = 2, 4, 16                            # head_num=4, q_len=16
    attn = jax.random.normal(k1, (B, H, L, L), dtype=jnp.float32)
    rnn_inductive = jax.random.uniform(k2, (L, L), jnp.float32, -3.0, 3.0)
    weight_u = jax.random.normal(k3, (1,), dtype=jnp.float32)

    out, u = rnn_attention_score(attn, rnn_inductive, weight_u)
    jax.block_until_ready((out, u))

    out_ref, u_ref = _reference(attn, rnn_inductive, weight_u)
    assert out.shape == attn.shape and u.shape == (1,)
    assert jnp.allclose(u, u_ref, atol=1e-6, rtol=1e-6)
    assert jnp.allclose(out, out_ref, atol=1e-5, rtol=1e-5)
    print("KERNEL_OK")
</pallas_src>

<mosaic_0001>
module attributes {stable_mosaic.version = 11 : i64} {
  func.func @_prep_kernel(%arg0: i32, %arg1: memref<1xf32, #tpu.memory_space<smem>>, %arg2: memref<16x16xf32, #tpu.memory_space<vmem>>, %arg3: memref<16x16xf32, #tpu.memory_space<vmem>>, %arg4: memref<16x16xf32, #tpu.memory_space<vmem>>) attributes {dimension_semantics = [#tpu.dimension_semantics<parallel>], iteration_bounds = array<i64: 1>, scalar_prefetch = 0 : i64, scratch_operands = 0 : i64, tpu.core_type = #tpu.core_type<tc>, window_params = [{transform_indices = @transform_0, window_bounds = array<i64: 1>}, {transform_indices = @transform_1, window_bounds = array<i64: 16, 16>}, {transform_indices = @transform_2, window_bounds = array<i64: 16, 16>}, {transform_indices = @transform_3, window_bounds = array<i64: 16, 16>}]} {
    %c16_i32 = arith.constant 16 : i32
    %0 = arith.muli %arg0, %c16_i32 : i32
    %1 = tpu.iota {dimensions = array<i32: 0>} : vector<16x16xi32>
    %2 = vector.broadcast %0 : i32 to vector<16x16xi32>
    %3 = arith.addi %1, %2 : vector<16x16xi32>
    %4 = tpu.iota {dimensions = array<i32: 1>} : vector<16x16xi32>
    %c0 = arith.constant 0 : index
    %c0_0 = arith.constant 0 : index
    %5 = vector.load %arg2[%c0, %c0_0] : memref<16x16xf32, #tpu.memory_space<vmem>>, vector<16x16xf32>
    %6 = arith.negf %5 : vector<16x16xf32>
    %7 = math.exp %6 : vector<16x16xf32>
    %cst = arith.constant 1.000000e+00 : f32
    %8 = vector.broadcast %cst : f32 to vector<16x16xf32>
    %9 = arith.addf %8, %7 : vector<16x16xf32>
    %10 = arith.divf %8, %9 : vector<16x16xf32>
    %c0_1 = arith.constant 0 : index
    %c0_2 = arith.constant 0 : index
    %11 = vector.load %arg3[%c0_1, %c0_2] : memref<16x16xf32, #tpu.memory_space<vmem>>, vector<16x16xf32>
    %12 = arith.negf %11 : vector<16x16xf32>
    %13 = math.exp %12 : vector<16x16xf32>
    %cst_3 = arith.constant 1.000000e+00 : f32
    %14 = vector.broadcast %cst_3 : f32 to vector<16x16xf32>
    %15 = arith.addf %14, %13 : vector<16x16xf32>
    %16 = arith.divf %14, %15 : vector<16x16xf32>
    %cst_4 = arith.constant 0.000000e+00 : f32
    %17 = vector.broadcast %cst_4 : f32 to vector<16x16xf32>
    %18 = arith.cmpi sgt, %3, %4 : vector<16x16xi32>
    %19 = arith.select %18, %10, %17 : vector<16x16xi1>, vector<16x16xf32>
    %20 = arith.cmpi slt, %3, %4 : vector<16x16xi32>
    %21 = arith.select %20, %16, %17 : vector<16x16xi1>, vector<16x16xf32>
    %22 = arith.addf %19, %21 : vector<16x16xf32>
    %c0_5 = arith.constant 0 : index
    %23 = memref.load %arg1[%c0_5] : memref<1xf32, #tpu.memory_space<smem>>
    %24 = vector.broadcast %23 : f32 to vector<16x16xf32>
    %25 = arith.mulf %24, %22 : vector<16x16xf32>
    %c0_6 = arith.constant 0 : index
    %c0_7 = arith.constant 0 : index
    %26 = vector.load %arg4[%c0_6, %c0_7] : memref<16x16xf32, #tpu.memory_space<vmem>>, vector<16x16xf32>
    tpu.vector_store %arg4[%c0_6, %c0_7], %25 {strides = array<i32>} : memref<16x16xf32, #tpu.memory_space<vmem>>, vector<16x16xf32>,
    return
  }
  func.func @transform_0(%arg0: i32) -> i32 {
    %c0_i32 = arith.constant 0 : i32
    %c0_i32_0 = arith.constant 0 : i32
    return %c0_i32 : i32
  }
  func.func @transform_1(%arg0: i32) -> (i32, i32) {
    %c0_i32 = arith.constant 0 : i32
    %c0_i32_0 = arith.constant 0 : i32
    return %arg0, %c0_i32 : i32, i32
  }
  func.func @transform_2(%arg0: i32) -> (i32, i32) {
    %c0_i32 = arith.constant 0 : i32
    %c0_i32_0 = arith.constant 0 : i32
    return %arg0, %c0_i32 : i32, i32
  }
  func.func @transform_3(%arg0: i32) -> (i32, i32) {
    %c0_i32 = arith.constant 0 : i32
    %c0_i32_0 = arith.constant 0 : i32
    return %arg0, %c0_i32 : i32, i32
  }
}

</mosaic_0001>

<llo_original>
// kernel: tpu_custom_call.1
$region0: #{tpu_custom_call.1}
  #allocation0 [shape = 'u32[]', space=smem, size = 0x4, offset = 0x4, fixed_abs, tag = 'smem constant byte address 0x4 - core index']
  #allocation1 [shape = 'u32[144,128]{1,0:T(1,128)}', space=vmem, size = 0x12000, scoped, tag = 'internal scratch']
  #allocation2 [shape = 'f32[1]{0:T(128)S(6)}', space=smem, size = 0x200, scoped, tag = 'scoped memory for tpu_custom_call.1']
  %s0 = inlined_call_operand.<no memory space> [shape: f32[1], index: 0, kind: input, shape index: {}]
  %s1 = inlined_call_operand.hbm [shape: f32[16,16], index: 1, kind: input, shape index: {}]
  %s2 = inlined_call_operand.hbm [shape: f32[16,16], index: 2, kind: input, shape index: {}]
  %s3 = inlined_call_operand.hbm [shape: f32[16,16], index: 3, kind: output, shape index: {}]
  %s4 = sld [smem:[#allocation0]]
  $region30: #{tpu_custom_call.1} parent=0
    _
  %s6 = ssub.s32 1, %s4
  %s7 = scalar_select 0, %s6, %s4
  %8 = sst [smem:[#allocation2]] %s0
  $region1: #{tpu_custom_call.1} parent=0
    #allocation3 [shape = 'u8[8192]{0}', space=vmem, size = 0x2000, scoped, tag = 'input window, operand 1, single buffered']
    #allocation4 [shape = 's32[1]{0}', space=sflag, size = 0x4, scoped, tag = 'scoped memory for tpu_custom_call.1']
    #allocation5 [shape = 's32[1]{0}', space=sflag, size = 0x4, scoped, tag = 'scoped memory for tpu_custom_call.1']
    #allocation6 [shape = 'u8[8192]{0}', space=vmem, size = 0x2000, scoped, tag = 'input window, operand 2, single buffered']
    #allocation7 [shape = 's32[1]{0}', space=sflag, size = 0x4, scoped, tag = 'scoped memory for tpu_custom_call.1']
    #allocation8 [shape = 'u8[8192]{0}', space=vmem, size = 0x2000, scoped, tag = 'output window, operand 0, single buffered']
    %9 = vsyncpa [#allocation4], 0
    %10 = vsyncpa [#allocation7], 0
    %11 = vsyncpa [#allocation5], 0
    // Predicated region
    $region2: #{tpu_custom_call.1} parent=1 // pred_check
      _
    $region3: #{tpu_custom_call.1} parent=1 // pred_check_branch
      %13 = sbr.rel (0) target = $region5
    $region4: #{tpu_custom_call.1} parent=1 // pred_region
      _
    $region5: #{tpu_custom_call.1} parent=1 // pred_fallthru
      _
    // Predicated region
    $region6: #{tpu_custom_call.1} parent=1 // pred_check
      _
    $region7: #{tpu_custom_call.1} parent=1 // pred_check_branch
      %15 = sbr.rel (0) target = $region9
    $region8: #{tpu_custom_call.1} parent=1 // pred_region
      %s17 = ssub.s32 256, 256
      %18 = vsyncadd [#allocation4], %s17
      %s19 = sshll.u32 [#allocation3], 4
      %s20 = int_to_ptr.vmem [resolvable:$true] %s19
      %25 = dma.hbm_to_vmem [thread:$0]  %s1, 256, %s20, [#allocation4], 128, 128, 8
    $region9: #{tpu_custom_call.1} parent=1 // pred_fallthru
      _
    // Predicated region
    $region10: #{tpu_custom_call.1} parent=1 // pred_check
      _
    $region11: #{tpu_custom_call.1} parent=1 // pred_check_branch
      %27 = sbr.rel (0) target = $region13
    $region12: #{tpu_custom_call.1} parent=1 // pred_region
      %s29 = ssub.s32 256, 256
      %30 = vsyncadd [#allocation7], %s29
      %s31 = sshll.u32 [#allocation6], 4
      %s32 = int_to_ptr.vmem [resolvable:$true] %s31
      %37 = dma.hbm_to_vmem [thread:$0]  %s2, 256, %s32, [#allocation7], 128, 128, 8
    $region13: #{tpu_custom_call.1} parent=1 // pred_fallthru
      _
    // Predicated region
    $region14: #{tpu_custom_call.1} parent=1 // pred_check
      _
    $region15: #{tpu_custom_call.1} parent=1 // pred_check_branch
      %39 = sbr.rel (0) target = $region17
    $region16: #{tpu_custom_call.1} parent=1 // pred_region
      %40 = dma.done [#allocation4], 256
    $region17: #{tpu_custom_call.1} parent=1 // pred_fallthru
      _
    // Predicated region
    $region18: #{tpu_custom_call.1} parent=1 // pred_check
      _
    $region19: #{tpu_custom_call.1} parent=1 // pred_check_branch
      %42 = sbr.rel (0) target = $region21
    $region20: #{tpu_custom_call.1} parent=1 // pred_region
      %43 = dma.done [#allocation7], 256
    $region21: #{tpu_custom_call.1} parent=1 // pred_fallthru
      _
    %s44 = smul.u32 0, 16
    %v45 = vlaneseq
    %v46 = vshrl.u32 %v45, 7
    %v47 = vadd.s32 %v46, 8
    %v48 = vstv %s44
    %v49 = vadd.s32 %v46, %v48
    %v50 = vadd.s32 %v47, %v48
    %v51 = vlaneseq
    %v52 = vand.u32 %v51, 127
    %v53 = vld [vmem:[#allocation3] sm:$0xff]
    %v54 = vld [vmem:[#allocation3 + $0x8] sm:$0xff]
    %v55 = vxor.u32 %v53, 2147483648
    %v56 = vxor.u32 %v54, 2147483648
    %v57 = vmul.f32 %v55, 1.442695
    %v58 = vpow.pop %v57
    %v59 = vmul.f32 %v56, 1.442695
    %v60 = vpow.pop %v59
    %v61 = vadd.f32 %v58, 1.0
    %v62 = vadd.f32 %v60, 1.0
    %v63 = vrcp.pop %v61
    %v64 = vmul.f32 1.0, %v63
    %v65 = vrcp.pop %v62
    %v66 = vmul.f32 1.0, %v65
    %v67 = vld [vmem:[#allocation6] sm:$0xff]
    %v68 = vld [vmem:[#allocation6 + $0x8] sm:$0xff]
    %v69 = vxor.u32 %v67, 2147483648
    %v70 = vxor.u32 %v68, 2147483648
    %v71 = vmul.f32 %v69, 1.442695
    %v72 = vpow.pop %v71
    %v73 = vmul.f32 %v70, 1.442695
    %v74 = vpow.pop %v73
    %v75 = vadd.f32 %v72, 1.0
    %v76 = vadd.f32 %v74, 1.0
    %v77 = vrcp.pop %v75
    %v78 = vmul.f32 1.0, %v77
    %v79 = vrcp.pop %v76
    %v80 = vmul.f32 1.0, %v79
    %vm81 = vcmp.gt.s32.totalorder %v49, %v52
    %vm82 = vcmp.gt.s32.totalorder %v50, %v52
    %v83 = vsel %vm81, %v64, 0.0
    %v84 = vsel %vm82, %v66, 0.0
    %vm85 = vcmp.lt.s32.totalorder %v49, %v52
    %vm86 = vcmp.lt.s32.totalorder %v50, %v52
    %v87 = vsel %vm85, %v78, 0.0
    %v88 = vsel %vm86, %v80, 0.0
    %v89 = vadd.f32 %v83, %v87
    %v90 = vadd.f32 %v84, %v88
    %s91 = sld [smem:[#allocation2]]
    %v92 = vstv %s91
    %v93 = vmul.f32 %v92, %v89
    %v94 = vmul.f32 %v92, %v90
    %vm95 = vcmask 130048
    %96 = vst.msk [vmem:[#allocation8] sm:$0xff] %vm95, %v93
    %97 = vst.msk [vmem:[#allocation8 + $0x8] sm:$0xff] %vm95, %v94
    // Predicated region
    $region22: #{tpu_custom_call.1} parent=1 // pred_check
      _
    $region23: #{tpu_custom_call.1} parent=1 // pred_check_branch
      %99 = sbr.rel (0) target = $region25
    $region24: #{tpu_custom_call.1} parent=1 // pred_region
      %s101 = ssub.s32 256, 256
      %102 = vsyncadd [#allocation5], %s101
      %s103 = sshll.u32 [#allocation8], 4
      %s104 = int_to_ptr.vmem [resolvable:$true] %s103
      %109 = dma.vmem_to_hbm [thread:$0]  %s104, 256, %s3, [#allocation5], 128, 128, 8
    $region25: #{tpu_custom_call.1} parent=1 // pred_fallthru
      _
    // Predicated region
    $region26: #{tpu_custom_call.1} parent=1 // pred_check
      _
    $region27: #{tpu_custom_call.1} parent=1 // pred_check_branch
      %111 = sbr.rel (0) target = $region29
    $region28: #{tpu_custom_call.1} parent=1 // pred_region
      %112 = dma.done [#allocation5], 256
    $region29: #{tpu_custom_call.1} parent=1 // pred_fallthru
      _
    %113 = vsyncpa [#allocation4], 1
    %114 = vsyncpa [#allocation7], 1
    %115 = vsyncpa [#allocation5], 1

</llo_original>
